<compile_context>
chip_gen: v7x
topology: tpu7x:2x2x1
jax: 0.10.0
libtpu: 0.0.40
codegen_flags: <defaults>
</compile_context>

<pallas_src>
import functools
import math

import jax
import jax.numpy as jnp
from jax import lax
from jax.experimental import pallas as pl
from jax.experimental.pallas import tpu as pltpu

TB = 128                         # ids handled per grid step (MXU M dim / DMA batch)
RESIDENT_MAX_ROWS = 1024         # table rows above this -> streamed / DMA path
RESIDENT_VMEM_BUDGET = 8 << 20   # bytes incl. the pipeline double buffer (v5e's default
                                 # scoped VMEM is 16 MiB; leave half for other operands)
STREAM_TV = 512                  # table rows streamed HBM->VMEM per step (dense-id path)
STREAM_DENSITY = 8               # streamed path when ids cover >= 1/8 of the table rows
DMA_UNROLL = 8                   # unroll factor of the per-row DMA issue loop


def _fits_vmem(arr):
    # x2: constant-index_map inputs are still double-buffered by the pipeline.
    return (int(arr.shape[0]) <= RESIDENT_MAX_ROWS
            and 2 * int(arr.size) * arr.dtype.itemsize <= RESIDENT_VMEM_BUDGET)


def _pad_ids(ids, tb):
    n = int(ids.shape[0])
    n_pad = -(-n // tb) * tb
    ids32 = ids.astype(jnp.int32)
    if n_pad != n:
        ids32 = jnp.pad(ids32, (0, n_pad - n))   # padded ids -> row 0 (always valid)
    return ids32, n, n_pad


def _pad_cols_to_128(a):
    """Pad last dim to a multiple of 128 lanes (unmasked output stores)."""
    e = int(a.shape[1])
    ep = -(-e // 128) * 128
    if ep == e:
        return a
    return jnp.pad(a, ((0, 0), (0, ep - e)))


# ----------------------------------------------------------------------------
# Resident kernel: whole table in VMEM, gather = one-hot MXU matmul.
# ----------------------------------------------------------------------------
def _onehot_lookup_resident_kernel(ids_ref, table_ref, out_ref):
    ids = ids_ref[...]                                   # (TB, 1) int32
    tb = ids.shape[0]
    v = table_ref.shape[0]
    onehot = lax.broadcasted_iota(jnp.int32, (tb, v), 1) == ids
    out_ref[...] = jnp.dot(
        onehot.astype(table_ref.dtype), table_ref[...],
        preferred_element_type=jnp.float32,
    ).astype(out_ref.dtype)


# ----------------------------------------------------------------------------
# Streamed kernel: table streams over a reduction grid axis, VMEM accumulator.
# ----------------------------------------------------------------------------
def _onehot_lookup_streamed_kernel(ids_ref, table_ref, out_ref, acc_ref, *, v_total):
    k = pl.program_id(1)

    @pl.when(k == 0)
    def _():
        acc_ref[...] = jnp.zeros_like(acc_ref)

    ids = ids_ref[...]                                   # (TB, 1) int32
    tb = ids.shape[0]
    tv = table_ref.shape[0]
    row0 = k * tv
    onehot = lax.broadcasted_iota(jnp.int32, (tb, tv), 1) == (ids - row0)
    # zero slab rows beyond the real table end (boundary-block contents are undefined)
    valid = (lax.broadcasted_iota(jnp.int32, (tv, 1), 0) + row0) < v_total
    slab = jnp.where(valid, table_ref[...], jnp.zeros_like(table_ref[...]))
    acc_ref[...] += jnp.dot(onehot.astype(slab.dtype), slab,
                            preferred_element_type=jnp.float32)

    @pl.when(k == pl.num_programs(1) - 1)
    def _():
        out_ref[...] = acc_ref[...].astype(out_ref.dtype)


# ----------------------------------------------------------------------------
# DMA-gather kernels (table / feats stay in HBM, ids scalar-prefetched in SMEM).
# ----------------------------------------------------------------------------
def _lookup_dma_kernel(ids_ref, table_hbm, out_hbm, sem, *, tb):
    """Pure gather: per-row HBM->HBM DMAs straight into the output (no staging)."""
    b = pl.program_id(0)
    nb = pl.num_programs(0)
    slot = b % 2
    base = pl.multiple_of(b * tb, tb)

    def issue(r, carry):
        row = ids_ref[base + r]
        pltpu.make_async_copy(table_hbm.at[row], out_hbm.at[base + r],
                              sem.at[slot]).start()
        return carry

    lax.fori_loop(0, tb, issue, 0, unroll=DMA_UNROLL)

    def drain(s):
        # one bulk wait per slot: descriptor bytes == sum of the tb row copies
        blk_view = out_hbm.at[pl.ds(0, tb)]
        pltpu.make_async_copy(blk_view, blk_view, sem.at[s]).wait()

    @pl.when(b > 0)
    def _():
        drain((b + 1) % 2)        # previous block's slot (overlaps with our issues)

    @pl.when(b == nb - 1)
    def _():
        drain(slot)               # final block: drain our own copies before exit


def _gather_project_dma_kernel(ids_ref, feats_hbm, w_ref, out_ref, buf, sem, *, tb):
    """Gather feature rows into a double-buffered VMEM slab, project on the MXU."""
    b = pl.program_id(0)
    nb = pl.num_programs(0)
    slot = b % 2

    def issue(blk, s):
        base = pl.multiple_of(blk * tb, tb)

        def body(r, carry):
            row = ids_ref[base + r]
            pltpu.make_async_copy(feats_hbm.at[row], buf.at[s, r], sem.at[s]).start()
            return carry

        lax.fori_loop(0, tb, body, 0, unroll=DMA_UNROLL)

    @pl.when(b == 0)
    def _():
        issue(b, slot)            # prime slot 0

    @pl.when(b + 1 < nb)
    def _():
        issue(b + 1, (b + 1) % 2)  # prefetch next block (SMEM ids read before the wait)

    # one bulk wait drains all tb row copies of this block's slot
    pltpu.make_async_copy(buf.at[slot], buf.at[slot], sem.at[slot]).wait()

    # TODO(synk): optional bf16 cast of buf/w for the MXU on v6e/v7x (kept f32).
    out_ref[...] = jnp.dot(buf[slot], w_ref[...],
                           preferred_element_type=jnp.float32).astype(out_ref.dtype)


# ----------------------------------------------------------------------------
# Small single-block matmul (used to pre-project small feature tables).
# ----------------------------------------------------------------------------
def _matmul_kernel(a_ref, b_ref, o_ref):
    o_ref[...] = jnp.dot(a_ref[...], b_ref[...],
                         preferred_element_type=jnp.float32).astype(o_ref.dtype)


def _matmul_small(a, b):
    m, n = int(a.shape[0]), int(b.shape[1])
    return pl.pallas_call(
        _matmul_kernel,
        out_shape=jax.ShapeDtypeStruct((m, n), jnp.float32),
    )(a, b)


# ----------------------------------------------------------------------------
# Wrappers
# ----------------------------------------------------------------------------
def embedding_lookup(table, ids, *, tb=TB, path=None, stream_tv=STREAM_TV):
    """out = table[ids]   (featureless ntype: nn.Embedding(sparse=True) forward)."""
    v, e = int(table.shape[0]), int(table.shape[1])
    if int(ids.shape[0]) == 0:
        return jnp.zeros((0, e), table.dtype)
    ids_p, n, n_pad = _pad_ids(ids, tb)
    nb = n_pad // tb

    if path is None:
        if _fits_vmem(table):
            path = "resident"          # whole table in VMEM, one-hot MXU gather
        elif n_pad * STREAM_DENSITY >= v:
            path = "streamed"          # dense ids: stream the table at HBM bandwidth
        else:
            path = "dma"               # sparse ids: per-row HBM gather DMAs

    if path == "resident":
        tbl = _pad_cols_to_128(table)
        ep = int(tbl.shape[1])
        out = pl.pallas_call(
            _onehot_lookup_resident_kernel,
            out_shape=jax.ShapeDtypeStruct((n_pad, ep), table.dtype),
            grid=(nb,),
            in_specs=[
                pl.BlockSpec((tb, 1), lambda b: (b, 0)),        # ids block
                pl.BlockSpec((v, ep), lambda b: (0, 0)),        # whole table resident
            ],
            out_specs=pl.BlockSpec((tb, ep), lambda b: (b, 0)),
            compiler_params=pltpu.CompilerParams(
                dimension_semantics=("parallel",)),
        )(ids_p.reshape(n_pad, 1), tbl)
        return out[:n, :e]

    if path == "streamed":
        tv = min(stream_tv, -(-v // 8) * 8)
        tv = max(8, (tv // 8) * 8)
        kern = functools.partial(_onehot_lookup_streamed_kernel, v_total=v)
        # TODO(synk): pad e to 128 lanes here too (perf only; padding a large
        #             HBM table per call is not worth it).
        out = pl.pallas_call(
            kern,
            out_shape=jax.ShapeDtypeStruct((n_pad, e), table.dtype),
            grid=(nb, pl.cdiv(v, tv)),
            in_specs=[
                pl.BlockSpec((tb, 1), lambda i, k: (i, 0)),     # ids (same across k)
                pl.BlockSpec((tv, e), lambda i, k: (k, 0)),     # table slab streams over k
            ],
            out_specs=pl.BlockSpec((tb, e), lambda i, k: (i, 0)),
            scratch_shapes=[pltpu.VMEM((tb, e), jnp.float32)],
            compiler_params=pltpu.CompilerParams(
                dimension_semantics=("parallel", "arbitrary")),
        )(ids_p.reshape(n_pad, 1), table)
        return out[:n]

    # "dma": direct HBM->HBM row gather, no VMEM staging (pure copy, no compute)
    kern = functools.partial(_lookup_dma_kernel, tb=tb)
    out = pl.pallas_call(
        kern,
        out_shape=jax.ShapeDtypeStruct((n_pad, e), table.dtype),
        grid_spec=pltpu.PrefetchScalarGridSpec(
            num_scalar_prefetch=1,
            grid=(nb,),
            in_specs=[pl.BlockSpec(memory_space=pl.ANY)],       # table stays in HBM
            out_specs=pl.BlockSpec(memory_space=pl.ANY),        # gather straight into out
            scratch_shapes=[pltpu.SemaphoreType.DMA((2,))],
        ),
        # cross-step semaphore slots -> order-dependent steps
        compiler_params=pltpu.CompilerParams(dimension_semantics=("arbitrary",)),
    )(ids_p, table)
    return out[:n]


def gather_project(feats, w, ids, *, tb=TB, path=None):
    """out = feats[ids] @ w   (featured ntype path)."""
    v = int(feats.shape[0])
    din, e = int(w.shape[0]), int(w.shape[1])
    if int(ids.shape[0]) == 0:
        return jnp.zeros((0, e), jnp.float32)

    if path is None:
        matmul_vmem = 4 * (int(feats.size) + din * e + v * e)
        path = ("resident"
                if _fits_vmem(feats) and matmul_vmem <= RESIDENT_VMEM_BUDGET
                else "dma")
        # TODO(synk): streamed dense-id variant for huge feature tables
        #             (project whole table once, then streamed one-hot lookup).

    if path == "resident":
        # associativity: onehot @ (feats @ w) == (onehot @ feats) @ w, and the
        # one-hot row-select is exact -> project the small table once, then it
        # is a plain lookup (and Din no longer needs to be VMEM-resident).
        proj = _matmul_small(feats, w)                   # (V, E) float32
        return embedding_lookup(proj, ids, tb=tb)

    # "dma": feats stay in HBM; gather rows into a double-buffered VMEM slab,
    # project on the MXU.
    ids_p, n, n_pad = _pad_ids(ids, tb)
    nb = n_pad // tb
    w_p = _pad_cols_to_128(w)
    ep = int(w_p.shape[1])
    kern = functools.partial(_gather_project_dma_kernel, tb=tb)
    out = pl.pallas_call(
        kern,
        out_shape=jax.ShapeDtypeStruct((n_pad, ep), jnp.float32),
        grid_spec=pltpu.PrefetchScalarGridSpec(
            num_scalar_prefetch=1,
            grid=(nb,),
            in_specs=[
                pl.BlockSpec(memory_space=pl.ANY),               # feats in HBM
                pl.BlockSpec((din, ep), lambda b, ids: (0, 0)),  # W resident in VMEM
            ],
            out_specs=pl.BlockSpec((tb, ep), lambda b, ids: (b, 0)),
            scratch_shapes=[
                pltpu.VMEM((2, tb, din), feats.dtype),           # double-buffered rows
                pltpu.SemaphoreType.DMA((2,)),
            ],
        ),
        compiler_params=pltpu.CompilerParams(dimension_semantics=("arbitrary",)),
    )(ids_p, feats, w_p)
    return out[:n, :e]


class RelGraphEmbedPallas:
    """JAX/Pallas port of RelGraphEmbed (activation=None, dropout=0.0 -> identities)."""

    def __init__(self, ntypes, num_nodes, node_feats, embed_size, key):
        self.ntypes = list(ntypes)
        self.node_feats = node_feats
        self.embed_size = embed_size
        self.params = {}
        for ntype in self.ntypes:
            key, sub = jax.random.split(key)
            if node_feats[ntype] is None:
                # nn.Embedding(num_nodes, embed_size, sparse=True), init.uniform_(-1, 1)
                self.params[ntype] = ("table", jax.random.uniform(
                    sub, (num_nodes[ntype], embed_size), jnp.float32, -1.0, 1.0))
            else:
                # nn.Parameter((input_emb_size, embed_size)), xavier_uniform_
                din = int(node_feats[ntype].shape[1])
                limit = math.sqrt(6.0 / (din + embed_size))
                self.params[ntype] = ("proj", jax.random.uniform(
                    sub, (din, embed_size), jnp.float32, -limit, limit))

    def forward(self, block_nodes):
        """block_nodes: dict ntype -> int32 array of node ids (block.nodes(ntype))."""
        embeds = {}
        for ntype, ids in block_nodes.items():
            kind, p = self.params[ntype]
            if kind == "table":
                embeds[ntype] = embedding_lookup(p, ids)
            else:
                embeds[ntype] = gather_project(self.node_feats[ntype], p, ids)
        return embeds


if __name__ == "__main__":
    key = jax.random.PRNGKey(0)
    k_feat, k_u, k_i, k_bu, k_bi, k_odd, k_oddi, k_params = jax.random.split(key, 8)

    embed_size = 128
    ntypes = ["user", "item"]
    num_nodes = {"user": 64, "item": 48}
    # "user" is featureless -> sparse embedding; "item" has input features -> projection.
    node_feats = {
        "user": None,
        "item": jax.random.normal(k_feat, (48, 256), jnp.float32),
    }

    model = RelGraphEmbedPallas(ntypes, num_nodes, node_feats, embed_size, k_params)

    # block.nodes(ntype): node ids present in the sampled block
    block_nodes = {
        "user": jax.random.randint(k_u, (16,), 0, num_nodes["user"], jnp.int32),
        "item": jax.random.randint(k_i, (12,), 0, num_nodes["item"], jnp.int32),
    }

    out = model.forward(block_nodes)
    out = jax.tree_util.tree_map(jax.block_until_ready, out)

    table_user = model.params["user"][1]
    w_item = model.params["item"][1]
    ref_user = table_user[block_nodes["user"]]
    ref_item = node_feats["item"][block_nodes["item"]] @ w_item
    assert out["user"].shape == (16, embed_size) and out["item"].shape == (12, embed_size)
    assert jnp.allclose(out["user"], ref_user, atol=5e-3)
    assert jnp.allclose(out["item"], ref_item, rtol=2e-2, atol=2e-2)

    # Exercise every code path over several grid steps.
    ids_big_u = jax.random.randint(k_bu, (300,), 0, num_nodes["user"], jnp.int32)
    ids_big_i = jax.random.randint(k_bi, (300,), 0, num_nodes["item"], jnp.int32)
    ref_big_u = table_user[ids_big_u]
    ref_big_i = node_feats["item"][ids_big_i] @ w_item

    res_u = jax.block_until_ready(embedding_lookup(table_user, ids_big_u, path="resident"))
    stm_u = jax.block_until_ready(
        embedding_lookup(table_user, ids_big_u, path="streamed", stream_tv=24))
    dma_u = jax.block_until_ready(embedding_lookup(table_user, ids_big_u, path="dma"))
    assert jnp.allclose(res_u, ref_big_u, atol=5e-3)
    assert jnp.allclose(stm_u, ref_big_u, atol=5e-3)
    assert jnp.allclose(dma_u, ref_big_u, atol=1e-5)   # pure byte-copy gather

    res_i = jax.block_until_ready(
        gather_project(node_feats["item"], w_item, ids_big_i, path="resident"))
    dma_i = jax.block_until_ready(
        gather_project(node_feats["item"], w_item, ids_big_i, path="dma"))
    assert jnp.allclose(res_i, ref_big_i, rtol=2e-2, atol=2e-2)
    assert jnp.allclose(dma_i, ref_big_i, rtol=2e-2, atol=2e-2)

    # Non-multiple-of-128 embedding width (lane-padding guard).
    table_odd = jax.random.uniform(k_odd, (40, 72), jnp.float32, -1.0, 1.0)
    ids_odd = jax.random.randint(k_oddi, (20,), 0, 40, jnp.int32)
    odd_out = jax.block_until_ready(embedding_lookup(table_odd, ids_odd))
    assert odd_out.shape == (20, 72)
    assert jnp.allclose(odd_out, table_odd[ids_odd], atol=5e-3)

    w_odd = jax.random.normal(k_odd, (256, 72), jnp.float32) * 0.05
    odd_proj = jax.block_until_ready(
        gather_project(node_feats["item"], w_odd, ids_big_i, path="dma"))
    assert odd_proj.shape == (300, 72)
    assert jnp.allclose(odd_proj, node_feats["item"][ids_big_i] @ w_odd,
                        rtol=2e-2, atol=2e-2)

    print("KERNEL_OK")
</pallas_src>

<mosaic_0001>
module attributes {stable_mosaic.version = 11 : i64} {
  func.func @_onehot_lookup_resident_kernel(%arg0: i32, %arg1: memref<128x1xi32, #tpu.memory_space<vmem>>, %arg2: memref<64x128xf32, #tpu.memory_space<vmem>>, %arg3: memref<128x128xf32, #tpu.memory_space<vmem>>) attributes {dimension_semantics = [#tpu.dimension_semantics<parallel>], iteration_bounds = array<i64: 1>, scalar_prefetch = 0 : i64, scratch_operands = 0 : i64, tpu.core_type = #tpu.core_type<tc>, window_params = [{transform_indices = @transform_0, window_bounds = array<i64: 128, 1>}, {pipeline_mode = #tpu.pipeline_mode<synchronous>, transform_indices = @transform_1, window_bounds = array<i64: 64, 128>}, {transform_indices = @transform_2, window_bounds = array<i64: 128, 128>}]} {
    %c0 = arith.constant 0 : index
    %c0_0 = arith.constant 0 : index
    %0 = vector.load %arg1[%c0, %c0_0] : memref<128x1xi32, #tpu.memory_space<vmem>>, vector<128x1xi32>
    %1 = tpu.iota {dimensions = array<i32: 1>} : vector<128x64xi32>
    %2 = vector.broadcast %0 : vector<128x1xi32> to vector<128x64xi32>
    %3 = arith.cmpi eq, %1, %2 : vector<128x64xi32>
    %4 = arith.extui %3 : vector<128x64xi1> to vector<128x64xi32>
    %5 = arith.sitofp %4 : vector<128x64xi32> to vector<128x64xf32>
    %c0_1 = arith.constant 0 : index
    %c0_2 = arith.constant 0 : index
    %6 = vector.load %arg2[%c0_1, %c0_2] : memref<64x128xf32, #tpu.memory_space<vmem>>, vector<64x128xf32>
    %cst = arith.constant dense<0.000000e+00> : vector<128x128xf32>
    %7 = tpu.matmul %5, %6, %cst {dimension_numbers = #tpu.dot_dimension_numbers<[1], [0], [0], [1], [0, 0, 1, 1], [], []>} : vector<128x64xf32>, vector<64x128xf32>, vector<128x128xf32> -> vector<128x128xf32>
    %c0_3 = arith.constant 0 : index
    %c0_4 = arith.constant 0 : index
    %8 = vector.load %arg3[%c0_3, %c0_4] : memref<128x128xf32, #tpu.memory_space<vmem>>, vector<128x128xf32>
    tpu.vector_store %arg3[%c0_3, %c0_4], %7 {strides = array<i32>} : memref<128x128xf32, #tpu.memory_space<vmem>>, vector<128x128xf32>,
    return
  }
  func.func @transform_0(%arg0: i32) -> (i32, i32) {
    %c0_i32 = arith.constant 0 : i32
    %c0_i32_0 = arith.constant 0 : i32
    return %arg0, %c0_i32 : i32, i32
  }
  func.func @transform_1(%arg0: i32) -> (i32, i32) {
    %c0_i32 = arith.constant 0 : i32
    %c0_i32_0 = arith.constant 0 : i32
    %c0_i32_1 = arith.constant 0 : i32
    return %c0_i32, %c0_i32_0 : i32, i32
  }
  func.func @transform_2(%arg0: i32) -> (i32, i32) {
    %c0_i32 = arith.constant 0 : i32
    %c0_i32_0 = arith.constant 0 : i32
    return %arg0, %c0_i32 : i32, i32
  }
}

</mosaic_0001>

<llo_original>
// kernel: tpu_custom_call.1
$region0: #{tpu_custom_call.1}
  #allocation0 [shape = 'u32[]', space=smem, size = 0x4, offset = 0x4, fixed_abs, tag = 'smem constant byte address 0x4 - core index']
  #allocation1 [shape = 'u32[144,128]{1,0:T(1,128)}', space=vmem, size = 0x12000, scoped, tag = 'internal scratch']
  %s0 = inlined_call_operand.vmem [shape: s32[128,1], index: 0, kind: input, shape index: {}]
  %s1 = inlined_call_operand.vmem [shape: f32[64,128], index: 1, kind: input, shape index: {}]
  %s2 = inlined_call_operand.hbm [shape: f32[128,128], index: 2, kind: output, shape index: {}]
  %s3 = sld [smem:[#allocation0]]
  $region18: #{tpu_custom_call.1} parent=0
    _
  %s5 = ssub.s32 1, %s3
  %s6 = scalar_select 0, %s5, %s3
  $region1: #{tpu_custom_call.1} parent=0
    #allocation2 [shape = 'u8[65536]{0}', space=vmem, size = 0x10000, scoped, tag = 'output window, operand 0, single buffered']
    #allocation3 [shape = 's32[1]{0}', space=sflag, size = 0x4, scoped, tag = 'scoped memory for tpu_custom_call.1']
    %7 = vsyncpa [#allocation3], 0
    // Predicated region
    $region2: #{tpu_custom_call.1} parent=1 // pred_check
      _
    $region3: #{tpu_custom_call.1} parent=1 // pred_check_branch
      %9 = sbr.rel (0) target = $region5
    $region4: #{tpu_custom_call.1} parent=1 // pred_region
      _
    $region5: #{tpu_custom_call.1} parent=1 // pred_fallthru
      _
    // Predicated region
    $region6: #{tpu_custom_call.1} parent=1 // pred_check
      _
    $region7: #{tpu_custom_call.1} parent=1 // pred_check_branch
      %11 = sbr.rel (0) target = $region9
    $region8: #{tpu_custom_call.1} parent=1 // pred_region
      _
    $region9: #{tpu_custom_call.1} parent=1 // pred_fallthru
      _
    %v12 = vld [vmem:[%s0] sm:$0xff]
    %v13 = vld [vmem:[%s0 + $0x8] sm:$0xff]
    %v14 = vld [vmem:[%s0 + $0x10] sm:$0xff]
    %v15 = vld [vmem:[%s0 + $0x18] sm:$0xff]
    %v16 = vld [vmem:[%s0 + $0x20] sm:$0xff]
    %v17 = vld [vmem:[%s0 + $0x28] sm:$0xff]
    %v18 = vld [vmem:[%s0 + $0x30] sm:$0xff]
    %v19 = vld [vmem:[%s0 + $0x38] sm:$0xff]
    %v20 = vld [vmem:[%s0 + $0x40] sm:$0xff]
    %v21 = vld [vmem:[%s0 + $0x48] sm:$0xff]
    %v22 = vld [vmem:[%s0 + $0x50] sm:$0xff]
    %v23 = vld [vmem:[%s0 + $0x58] sm:$0xff]
    %v24 = vld [vmem:[%s0 + $0x60] sm:$0xff]
    %v25 = vld [vmem:[%s0 + $0x68] sm:$0xff]
    %v26 = vld [vmem:[%s0 + $0x70] sm:$0xff]
    %v27 = vld [vmem:[%s0 + $0x78] sm:$0xff]
    %v28 = vlaneseq
    %v29 = vand.u32 %v28, 127
    %30 = vset.pattern.permute.xlu0 0
    %31 = vperm.xlu0 %30, %v12
    %v32 = vpop.permute.xlu0 %31
    %33 = vset.pattern.permute.xlu0 0
    %34 = vperm.xlu0 %33, %v13
    %v35 = vpop.permute.xlu0 %34
    %36 = vset.pattern.permute.xlu0 0
    %37 = vperm.xlu0 %36, %v14
    %v38 = vpop.permute.xlu0 %37
    %39 = vset.pattern.permute.xlu0 0
    %40 = vperm.xlu0 %39, %v15
    %v41 = vpop.permute.xlu0 %40
    %42 = vset.pattern.permute.xlu0 0
    %43 = vperm.xlu0 %42, %v16
    %v44 = vpop.permute.xlu0 %43
    %45 = vset.pattern.permute.xlu0 0
    %46 = vperm.xlu0 %45, %v17
    %v47 = vpop.permute.xlu0 %46
    %48 = vset.pattern.permute.xlu0 0
    %49 = vperm.xlu0 %48, %v18
    %v50 = vpop.permute.xlu0 %49
    %51 = vset.pattern.permute.xlu0 0
    %52 = vperm.xlu0 %51, %v19
    %v53 = vpop.permute.xlu0 %52
    %54 = vset.pattern.permute.xlu0 0
    %55 = vperm.xlu0 %54, %v20
    %v56 = vpop.permute.xlu0 %55
    %57 = vset.pattern.permute.xlu0 0
    %58 = vperm.xlu0 %57, %v21
    %v59 = vpop.permute.xlu0 %58
    %60 = vset.pattern.permute.xlu0 0
    %61 = vperm.xlu0 %60, %v22
    %v62 = vpop.permute.xlu0 %61
    %63 = vset.pattern.permute.xlu0 0
    %64 = vperm.xlu0 %63, %v23
    %v65 = vpop.permute.xlu0 %64
    %66 = vset.pattern.permute.xlu0 0
    %67 = vperm.xlu0 %66, %v24
    %v68 = vpop.permute.xlu0 %67
    %69 = vset.pattern.permute.xlu0 0
    %70 = vperm.xlu0 %69, %v25
    %v71 = vpop.permute.xlu0 %70
    %72 = vset.pattern.permute.xlu0 0
    %73 = vperm.xlu0 %72, %v26
    %v74 = vpop.permute.xlu0 %73
    %75 = vset.pattern.permute.xlu0 0
    %76 = vperm.xlu0 %75, %v27
    %v77 = vpop.permute.xlu0 %76
    %vm78 = vcmp.eq.s32.totalorder %v29, %v32
    %vm79 = vcmp.eq.s32.totalorder %v29, %v35
    %vm80 = vcmp.eq.s32.totalorder %v29, %v38
    %vm81 = vcmp.eq.s32.totalorder %v29, %v41
    %vm82 = vcmp.eq.s32.totalorder %v29, %v44
    %vm83 = vcmp.eq.s32.totalorder %v29, %v47
    %vm84 = vcmp.eq.s32.totalorder %v29, %v50
    %vm85 = vcmp.eq.s32.totalorder %v29, %v53
    %vm86 = vcmp.eq.s32.totalorder %v29, %v56
    %vm87 = vcmp.eq.s32.totalorder %v29, %v59
    %vm88 = vcmp.eq.s32.totalorder %v29, %v62
    %vm89 = vcmp.eq.s32.totalorder %v29, %v65
    %vm90 = vcmp.eq.s32.totalorder %v29, %v68
    %vm91 = vcmp.eq.s32.totalorder %v29, %v71
    %vm92 = vcmp.eq.s32.totalorder %v29, %v74
    %vm93 = vcmp.eq.s32.totalorder %v29, %v77
    %v94 = vsel %vm78, 1, 0
    %v95 = vsel %vm79, 1, 0
    %v96 = vsel %vm80, 1, 0
    %v97 = vsel %vm81, 1, 0
    %v98 = vsel %vm82, 1, 0
    %v99 = vsel %vm83, 1, 0
    %v100 = vsel %vm84, 1, 0
    %v101 = vsel %vm85, 1, 0
    %v102 = vsel %vm86, 1, 0
    %v103 = vsel %vm87, 1, 0
    %v104 = vsel %vm88, 1, 0
    %v105 = vsel %vm89, 1, 0
    %v106 = vsel %vm90, 1, 0
    %v107 = vsel %vm91, 1, 0
    %v108 = vsel %vm92, 1, 0
    %v109 = vsel %vm93, 1, 0
    %v110 = vcvt.s32.f32 %v94
    %v111 = vcvt.s32.f32 %v95
    %v112 = vcvt.s32.f32 %v96
    %v113 = vcvt.s32.f32 %v97
    %v114 = vcvt.s32.f32 %v98
    %v115 = vcvt.s32.f32 %v99
    %v116 = vcvt.s32.f32 %v100
    %v117 = vcvt.s32.f32 %v101
    %v118 = vcvt.s32.f32 %v102
    %v119 = vcvt.s32.f32 %v103
    %v120 = vcvt.s32.f32 %v104
    %v121 = vcvt.s32.f32 %v105
    %v122 = vcvt.s32.f32 %v106
    %v123 = vcvt.s32.f32 %v107
    %v124 = vcvt.s32.f32 %v108
    %v125 = vcvt.s32.f32 %v109
    %v126 = vld [vmem:[%s1] sm:$0xff]
    %v127 = vld [vmem:[%s1 + $0x8] sm:$0xff]
    %v128 = vld [vmem:[%s1 + $0x10] sm:$0xff]
    %v129 = vld [vmem:[%s1 + $0x18] sm:$0xff]
    %v130 = vld [vmem:[%s1 + $0x20] sm:$0xff]
    %v131 = vld [vmem:[%s1 + $0x28] sm:$0xff]
    %v132 = vld [vmem:[%s1 + $0x30] sm:$0xff]
    %v133 = vld [vmem:[%s1 + $0x38] sm:$0xff]
    %vm134 = vcmask 523264
    %v136 = vsel %vm134, %v110, 0
    %v139 = vsel %vm134, %v111, 0
    %v142 = vsel %vm134, %v112, 0
    %v145 = vsel %vm134, %v113, 0
    %v148 = vsel %vm134, %v114, 0
    %v151 = vsel %vm134, %v115, 0
    %v154 = vsel %vm134, %v116, 0
    %v157 = vsel %vm134, %v117, 0
    %v160 = vsel %vm134, %v118, 0
    %v163 = vsel %vm134, %v119, 0
    %v166 = vsel %vm134, %v120, 0
    %v169 = vsel %vm134, %v121, 0
    %v172 = vsel %vm134, %v122, 0
    %v175 = vsel %vm134, %v123, 0
    %v178 = vsel %vm134, %v124, 0
    %v181 = vsel %vm134, %v125, 0
    %183 = vmatprep.subr.mxu0 0.0
    %184 = vmatpush1.msra.mxu0 %v126
    %185 = vmatprep.subr.mxu0 0.0
    %186 = vmatpush1.msra.mxu0 %v127
    %187 = vmatprep.subr.mxu0 0.0
    %188 = vmatpush1.msra.mxu0 %v128
    %189 = vmatprep.subr.mxu0 0.0
    %190 = vmatpush1.msra.mxu0 %v129
    %191 = vmatprep.subr.mxu0 0.0
    %192 = vmatpush1.msra.mxu0 %v130
    %193 = vmatprep.subr.mxu0 0.0
    %194 = vmatpush1.msra.mxu0 %v131
    %195 = vmatprep.subr.mxu0 0.0
    %196 = vmatpush1.msra.mxu0 %v132
    %197 = vmatprep.subr.mxu0 0.0
    %198 = vmatpush1.msra.mxu0 %v133
    %199 = vmatprep.subr.mxu0 0.0
    %200 = vmatpush1.msra.mxu0 0.0
    %201 = vmatprep.subr.mxu0 0.0
    %202 = vmatpush1.msra.mxu0 0.0
    %203 = vmatprep.subr.mxu0 0.0
    %204 = vmatpush1.msra.mxu0 0.0
    %205 = vmatprep.subr.mxu0 0.0
    %206 = vmatpush1.msra.mxu0 0.0
    %207 = vmatprep.subr.mxu0 0.0
    %208 = vmatpush1.msra.mxu0 0.0
    %209 = vmatprep.subr.mxu0 0.0
    %210 = vmatpush1.msra.mxu0 0.0
    %211 = vmatprep.subr.mxu0 0.0
    %212 = vmatpush1.msra.mxu0 0.0
    %213 = vmatprep.subr.mxu0 0.0
    %214 = vmatpush1.msra.mxu0 0.0
    %215 = vmatprep.subr.mxu0 0.0
    %216 = vmatpush1.msra.mxu0 0.0
    %217 = vmatprep.subr.mxu0 0.0
    %218 = vmatpush1.msra.mxu0 0.0
    %219 = vmatprep.subr.mxu0 0.0
    %220 = vmatpush1.msra.mxu0 0.0
    %221 = vmatprep.subr.mxu0 0.0
    %222 = vmatpush1.msra.mxu0 0.0
    %223 = vmatprep.subr.mxu0 0.0
    %224 = vmatpush1.msra.mxu0 0.0
    %225 = vmatprep.subr.mxu0 0.0
    %226 = vmatpush1.msra.mxu0 0.0
    %227 = vmatprep.subr.mxu0 0.0
    %228 = vmatpush1.msra.mxu0 0.0
    %229 = vmatprep.subr.mxu0 0.0
    %230 = vmatpush1.msra.mxu0 0.0
    %231 = vmatprep.subr.mxu0 0.0
    %232 = vmatpush1.msra.mxu0 0.0
    %233 = vmatprep.subr.mxu0 0.0
    %234 = vmatpush1.msra.mxu0 0.0
    %235 = vmatprep.subr.mxu0 0.0
    %236 = vmatpush1.msra.mxu0 0.0
    %237 = vmatprep.subr.mxu0 0.0
    %238 = vmatpush1.msra.mxu0 0.0
    %239 = vmatprep.subr.mxu0 0.0
    %240 = vmatpush1.msra.mxu0 0.0
    %241 = vmatprep.subr.mxu0 0.0
    %242 = vmatpush1.msra.mxu0 0.0
    %243 = vmatprep.subr.mxu0 0.0
    %244 = vmatpush1.msra.mxu0 0.0
    %245 = vmatprep.subr.mxu0 0.0
    %246 = vmatpush1.msra.mxu0 0.0
    %247 = vmatprep.mubr.f32.mxu0 0.0
    %248 = vmatmul.mubr.f32.gmra.mrb[0].mxu0 %v136
    %v249 = vpop.f32.mrb[0].mxu0
    %v250 = vadd.f32 0.0, %v249
    %v251 = vpop.f32.mrb[0].mxu0
    %252 = vmatprep.mubr.f32.mxu0 0.0
    %253 = vmatmul.mubr.f32.gmra.mrb[0].mxu0 %v139
    %v254 = vpop.f32.mrb[0].mxu0
    %v255 = vadd.f32 0.0, %v254
    %v256 = vpop.f32.mrb[0].mxu0
    %257 = vmatprep.mubr.f32.mxu0 0.0
    %258 = vmatmul.mubr.f32.gmra.mrb[0].mxu0 %v142
    %v259 = vpop.f32.mrb[0].mxu0
    %v260 = vadd.f32 0.0, %v259
    %v261 = vpop.f32.mrb[0].mxu0
    %262 = vmatprep.mubr.f32.mxu0 0.0
    %263 = vmatmul.mubr.f32.gmra.mrb[0].mxu0 %v145
    %v264 = vpop.f32.mrb[0].mxu0
    %v265 = vadd.f32 0.0, %v264
    %v266 = vpop.f32.mrb[0].mxu0
    %267 = vmatprep.mubr.f32.mxu0 0.0
    %268 = vmatmul.mubr.f32.gmra.mrb[0].mxu0 %v148
    %v269 = vpop.f32.mrb[0].mxu0
    %v270 = vadd.f32 0.0, %v269
    %v271 = vpop.f32.mrb[0].mxu0
    %272 = vmatprep.mubr.f32.mxu0 0.0
    %273 = vmatmul.mubr.f32.gmra.mrb[0].mxu0 %v151
    %v274 = vpop.f32.mrb[0].mxu0
    %v275 = vadd.f32 0.0, %v274
    %v276 = vpop.f32.mrb[0].mxu0
    %277 = vmatprep.mubr.f32.mxu0 0.0
    %278 = vmatmul.mubr.f32.gmra.mrb[0].mxu0 %v154
    %v279 = vpop.f32.mrb[0].mxu0
    %v280 = vadd.f32 0.0, %v279
    %v281 = vpop.f32.mrb[0].mxu0
    %282 = vmatprep.mubr.f32.mxu0 0.0
    %283 = vmatmul.mubr.f32.gmra.mrb[0].mxu0 %v157
    %v284 = vpop.f32.mrb[0].mxu0
    %v285 = vadd.f32 0.0, %v284
    %v286 = vpop.f32.mrb[0].mxu0
    %287 = vmatprep.mubr.f32.mxu0 0.0
    %288 = vmatmul.mubr.f32.gmra.mrb[0].mxu0 %v160
    %v289 = vpop.f32.mrb[0].mxu0
    %v290 = vadd.f32 0.0, %v289
    %v291 = vpop.f32.mrb[0].mxu0
    %292 = vmatprep.mubr.f32.mxu0 0.0
    %293 = vmatmul.mubr.f32.gmra.mrb[0].mxu0 %v163
    %v294 = vpop.f32.mrb[0].mxu0
    %v295 = vadd.f32 0.0, %v294
    %v296 = vpop.f32.mrb[0].mxu0
    %297 = vmatprep.mubr.f32.mxu0 0.0
    %298 = vmatmul.mubr.f32.gmra.mrb[0].mxu0 %v166
    %v299 = vpop.f32.mrb[0].mxu0
    %v300 = vadd.f32 0.0, %v299
    %v301 = vpop.f32.mrb[0].mxu0
    %302 = vmatprep.mubr.f32.mxu0 0.0
    %303 = vmatmul.mubr.f32.gmra.mrb[0].mxu0 %v169
    %v304 = vpop.f32.mrb[0].mxu0
    %v305 = vadd.f32 0.0, %v304
    %v306 = vpop.f32.mrb[0].mxu0
    %307 = vmatprep.mubr.f32.mxu0 0.0
    %308 = vmatmul.mubr.f32.gmra.mrb[0].mxu0 %v172
    %v309 = vpop.f32.mrb[0].mxu0
    %v310 = vadd.f32 0.0, %v309
    %v311 = vpop.f32.mrb[0].mxu0
    %312 = vmatprep.mubr.f32.mxu0 0.0
    %313 = vmatmul.mubr.f32.gmra.mrb[0].mxu0 %v175
    %v314 = vpop.f32.mrb[0].mxu0
    %v315 = vadd.f32 0.0, %v314
    %v316 = vpop.f32.mrb[0].mxu0
    %317 = vmatprep.mubr.f32.mxu0 0.0
    %318 = vmatmul.mubr.f32.gmra.mrb[0].mxu0 %v178
    %v319 = vpop.f32.mrb[0].mxu0
    %v320 = vadd.f32 0.0, %v319
    %v321 = vpop.f32.mrb[0].mxu0
    %322 = vmatprep.mubr.f32.mxu0 0.0
    %323 = vmatmul.mubr.f32.gmra.mrb[0].mxu0 %v181
    %v324 = vpop.f32.mrb[0].mxu0
    %v325 = vadd.f32 0.0, %v324
    %v326 = vpop.f32.mrb[0].mxu0
    %327 = vdwg.mxu0
    %328 = vst [vmem:[#allocation2] sm:$0xff] %v250
    %329 = vst [vmem:[#allocation2 + $0x8] sm:$0xff] %v255
    %330 = vst [vmem:[#allocation2 + $0x10] sm:$0xff] %v260
    %331 = vst [vmem:[#allocation2 + $0x18] sm:$0xff] %v265
    %332 = vst [vmem:[#allocation2 + $0x20] sm:$0xff] %v270
    %333 = vst [vmem:[#allocation2 + $0x28] sm:$0xff] %v275
    %334 = vst [vmem:[#allocation2 + $0x30] sm:$0xff] %v280
    %335 = vst [vmem:[#allocation2 + $0x38] sm:$0xff] %v285
    %336 = vst [vmem:[#allocation2 + $0x40] sm:$0xff] %v290
    %337 = vst [vmem:[#allocation2 + $0x48] sm:$0xff] %v295
    %338 = vst [vmem:[#allocation2 + $0x50] sm:$0xff] %v300
    %339 = vst [vmem:[#allocation2 + $0x58] sm:$0xff] %v305
    %340 = vst [vmem:[#allocation2 + $0x60] sm:$0xff] %v310
    %341 = vst [vmem:[#allocation2 + $0x68] sm:$0xff] %v315
    %342 = vst [vmem:[#allocation2 + $0x70] sm:$0xff] %v320
    %343 = vst [vmem:[#allocation2 + $0x78] sm:$0xff] %v325
    // Predicated region
    $region10: #{tpu_custom_call.1} parent=1 // pred_check
      _
    $region11: #{tpu_custom_call.1} parent=1 // pred_check_branch
      %345 = sbr.rel (0) target = $region13
    $region12: #{tpu_custom_call.1} parent=1 // pred_region
      %s347 = ssub.s32 2048, 2048
      %348 = vsyncadd [#allocation3], %s347
      %s349 = sshll.u32 [#allocation2], 4
      %s350 = int_to_ptr.vmem [resolvable:$true] %s349
      %355 = dma.vmem_to_hbm [thread:$0]  %s350, 2048, %s2, [#allocation3], 128, 128, 8
    $region13: #{tpu_custom_call.1} parent=1 // pred_fallthru
      _
    // Predicated region
    $region14: #{tpu_custom_call.1} parent=1 // pred_check
      _
    $region15: #{tpu_custom_call.1} parent=1 // pred_check_branch
      %357 = sbr.rel (0) target = $region17
    $region16: #{tpu_custom_call.1} parent=1 // pred_region
      %358 = dma.done [#allocation3], 2048
    $region17: #{tpu_custom_call.1} parent=1 // pred_fallthru
      _
    %359 = vsyncpa [#allocation3], 1

</llo_original>
